<compile_context>
chip_gen: v5e
topology: v5e:2x2
jax: 0.10.0
libtpu: 0.0.40
codegen_flags: <defaults>
</compile_context>

<pallas_src>
import functools
import numpy as np
import jax
import jax.numpy as jnp
from jax.experimental import pallas as pl
from jax.experimental.pallas import tpu as pltpu


# ----------------------------- Pallas kernel --------------------------------
def _feat_decoder_kernel(eh_ref, vis_ref, phrm_ref, wblk_ref, out_ref, *,
                         B, F, V, E, H, Pp, Hb1, Hb2, LANES):
    BPp = B * Pp
    Hb12 = Hb1 + Hb2
    r0 = E + V + H                                   # first param-vector row of wblk

    # ---- unpack the fused inputs (static slices) ----
    emb = eh_ref[:, 0:E]                             # (B, E)
    hid = eh_ref[:, E:E + H]                         # (B, H)
    phr = phrm_ref[:, 0:E]                           # (B*Pp, E)
    mask3 = phrm_ref[:, E:E + 1].reshape(B, Pp, 1)   # (B, Pp, 1), 1.0 == masked
    vis = vis_ref[...]                               # (B*F, V)

    Wphr = wblk_ref[0:E, :]                          # (E, Hb12) = [W_al^T | U_at[:,V:]^T]
    Wvis = wblk_ref[E:E + V, :]                      # (V, Hb12) = [U_al^T | U_at[:,:V]^T]
    WatT = wblk_ref[E + V:r0, 0:Hb2]                 # (H, Hb2)  = W_at^T
    b_al = wblk_ref[r0 + 0:r0 + 1, 0:Hb1]            # (1, Hb1)
    w_al = wblk_ref[r0 + 1:r0 + 2, 0:Hb1]            # (1, Hb1)
    b_at = wblk_ref[r0 + 2:r0 + 3, 0:Hb2]            # (1, Hb2)
    w_at = wblk_ref[r0 + 3:r0 + 4, 0:Hb2]            # (1, Hb2)

    # ---- whole-batch fused projections (one MXU push per operand) ----
    phr_proj = jnp.dot(phr, Wphr, preferred_element_type=jnp.float32)    # (B*Pp, Hb12)
    vis_proj = jnp.dot(vis, Wvis, preferred_element_type=jnp.float32)    # (B*F,  Hb12)
    Wh2 = jnp.dot(hid, WatT, preferred_element_type=jnp.float32) + b_at  # (B, Hb2)

    Wh = phr_proj[:, 0:Hb1].reshape(B, Pp, Hb1)          # phr @ W_al^T
    phrU = phr_proj[:, Hb1:Hb12].reshape(B, Pp, Hb2)     # phr @ U_at[:, V:]^T
    Uv = (vis_proj[:, 0:Hb1] + b_al).reshape(B, F, Hb1)  # vis @ U_al^T + b_al
    visU = vis_proj[:, Hb1:Hb12].reshape(B, F, Hb2)      # vis @ U_at[:, :V]^T

    def nr_recip(x):   # EUP approx reciprocal + one Newton-Raphson refinement
        r = pl.reciprocal(x, approx=True)
        return r * (2.0 - x * r)

    # ---------------- SemanticAlignment (batched over B) ----------------
    t = jnp.tanh(Wh[:, :, None, :] + Uv[:, None, :, :])               # (B, Pp, F, Hb1)
    align_logits = jnp.sum(t * w_al.reshape(1, 1, 1, Hb1), axis=-1)   # (B, Pp, F)
    m1 = jnp.max(align_logits, axis=-1, keepdims=True)
    e1 = jnp.exp(align_logits - m1)
    align_w = e1 * nr_recip(jnp.sum(e1, axis=-1, keepdims=True))      # (B, Pp, F)

    # ---------------- SemanticAttention (batched over B) ----------------
    # Reassociated: weighted_vis @ U_at[:, :V]^T == align_w @ (vis @ U_at[:, :V]^T)
    Uv2 = jnp.einsum('bpf,bfh->bph', align_w, visU,
                     preferred_element_type=jnp.float32) + phrU        # (B, Pp, Hb2)
    t2 = jnp.tanh(Wh2[:, None, :] + Uv2)                               # (B, Pp, Hb2)
    attn_logits = jnp.sum(t2 * w_at.reshape(1, 1, Hb2),
                          axis=-1, keepdims=True)                      # (B, Pp, 1)
    attn_logits = jnp.where(mask3 > 0.5, -jnp.inf, attn_logits)        # masked_fill
    m2 = jnp.max(attn_logits, axis=1, keepdims=True)
    e2 = jnp.exp(attn_logits - m2)
    attn_w = e2 * nr_recip(jnp.sum(e2, axis=1, keepdims=True))         # (B, Pp, 1)

    # ------ attended feature (group = [weighted_vis | phr] never built) ------
    weighted_vis = jnp.einsum('bpf,bfv->bpv', align_w, vis.reshape(B, F, V),
                              preferred_element_type=jnp.float32)      # (B, Pp, V)
    feat_vis = jnp.sum(weighted_vis * attn_w, axis=1)                  # (B, V)
    feat_phr = jnp.sum(phr.reshape(B, Pp, E) * attn_w, axis=1)         # (B, E)

    # ---------------- packed, lane-dense output slab ----------------
    row_pad = jnp.zeros((BPp, LANES - (2 * F + 2)), jnp.float32)
    out_ref[0:BPp, :] = jnp.concatenate(
        [align_logits.reshape(BPp, F), align_w.reshape(BPp, F),
         attn_logits.reshape(BPp, 1), attn_w.reshape(BPp, 1), row_pad], axis=-1)

    feat_pad = jnp.zeros((B, LANES - (V + 2 * E)), jnp.float32)
    out_ref[BPp:BPp + B, :] = jnp.concatenate(
        [feat_vis, feat_phr, emb, feat_pad], axis=-1)


# ------------------------------- wrapper -------------------------------------
@jax.jit
def feat_decoder(embedded, last_hidden, vis_feats, phr_feats, phr_masks, params):
    """JAX/Pallas equivalent of Feat_Decoder.forward."""
    (W_al, U_al, b_al, w_al, W_at, U_at, b_at, w_at) = params
    B, E = embedded.shape
    H = last_hidden.shape[1]
    F, V = vis_feats.shape[1], vis_feats.shape[2]
    P = phr_feats.shape[1]
    Hb1, Hb2 = W_al.shape[0], W_at.shape[0]
    Hb12 = Hb1 + Hb2
    Pp = -(-P // 8) * 8                                   # pad phrases to sublane multiple
    LANES = max(128, -(-max(2 * F + 2, V + 2 * E) // 128) * 128)
    f32 = jnp.float32

    # ---- fused inputs (4 DMAs total) ----
    eh = jnp.concatenate([embedded.astype(f32), last_hidden.astype(f32)], axis=1)   # (B, E+H)
    vis2 = vis_feats.astype(f32).reshape(B * F, V)                                  # (B*F, V)

    phr_p = jnp.pad(phr_feats.astype(f32), ((0, 0), (0, Pp - P), (0, 0)))           # (B, Pp, E)
    mask_p = jnp.pad(phr_masks.astype(f32), ((0, 0), (0, Pp - P)),
                     constant_values=1.0)                                            # (B, Pp)
    phrm = jnp.concatenate([phr_p, mask_p[:, :, None]], axis=-1).reshape(B * Pp, E + 1)

    # Single fused weight / parameter block (all layout work done here, outside the kernel).
    Wphr = jnp.concatenate([W_al.T, U_at[:, V:].T], axis=1).astype(f32)    # (E, Hb12)
    Wvis = jnp.concatenate([U_al.T, U_at[:, :V].T], axis=1).astype(f32)    # (V, Hb12)
    WatTp = jnp.pad(W_at.T.astype(f32), ((0, 0), (0, Hb12 - Hb2)))         # (H, Hb12)
    vecs = jnp.zeros((8, Hb12), f32)
    vecs = vecs.at[0, :Hb1].set(b_al[0].astype(f32))
    vecs = vecs.at[1, :Hb1].set(w_al[0].astype(f32))
    vecs = vecs.at[2, :Hb2].set(b_at[0].astype(f32))
    vecs = vecs.at[3, :Hb2].set(w_at[0].astype(f32))
    wblk = jnp.concatenate([Wphr, Wvis, WatTp, vecs], axis=0)              # (E+V+H+8, Hb12)

    R = B * Pp + B
    kernel = functools.partial(_feat_decoder_kernel, B=B, F=F, V=V, E=E, H=H,
                               Pp=Pp, Hb1=Hb1, Hb2=Hb2, LANES=LANES)

    # Advisory cost estimate (tiny kernel; keeps XLA from serializing around it).
    flops = (2 * (B * Pp * E * Hb12 + B * F * V * Hb12 + B * H * Hb2
                  + B * Pp * F * Hb2 + B * Pp * F * V)
             + 5 * B * Pp * F * Hb1 + 5 * B * Pp * Hb2)
    transcendentals = B * Pp * F * Hb1 + B * Pp * Hb2 + B * Pp * F + 3 * B * Pp
    bytes_accessed = 4 * (eh.size + vis2.size + phrm.size + wblk.size + R * LANES)

    out = pl.pallas_call(
        kernel,
        out_shape=jax.ShapeDtypeStruct((R, LANES), f32),
        cost_estimate=pl.CostEstimate(flops=flops, transcendentals=transcendentals,
                                      bytes_accessed=bytes_accessed),
    )(eh, vis2, phrm, wblk)

    # ---- split the packed slab back into the module's outputs ----
    rows = out[:B * Pp].reshape(B, Pp, LANES)
    alg = rows[:, :P, 0:F]                     # (B, P, F) alignment logits
    alw = rows[:, :P, F:2 * F]                 # (B, P, F) alignment weights
    atg = rows[:, :P, 2 * F]                   # (B, P)    attention logits (masked)
    atw = rows[:, :P, 2 * F + 1]               # (B, P)    attention weights
    frow = out[B * Pp:B * Pp + B]
    feat = frow[:, 0:V + 2 * E]                # (B, V+2E) [attn_feat | embedded]
    return feat, (alw, atw), (alg, atg)


# --------------------------- pure-JAX reference -------------------------------
def feat_decoder_ref(embedded, last_hidden, vis_feats, phr_feats, phr_masks, params):
    (W_al, U_al, b_al, w_al, W_at, U_at, b_at, w_at) = params
    Wh = jnp.einsum('bpe,he->bph', phr_feats, W_al)
    Uv = jnp.einsum('bfv,hv->bfh', vis_feats, U_al)
    t = jnp.tanh(Wh[:, :, None, :] + Uv[:, None, :, :] + b_al[0])
    align_logits = jnp.einsum('bpfh,h->bpf', t, w_al[0])
    align_w = jax.nn.softmax(align_logits, axis=2)
    weighted_vis = jnp.einsum('bpf,bfv->bpv', align_w, vis_feats)
    group = jnp.concatenate([weighted_vis, phr_feats], axis=2)
    Wh2 = jnp.einsum('bq,hq->bh', last_hidden, W_at)
    Uv2 = jnp.einsum('bpk,hk->bph', group, U_at)
    t2 = jnp.tanh(Wh2[:, None, :] + Uv2 + b_at[0])
    attn_logits = jnp.einsum('bph,h->bp', t2, w_at[0])
    attn_logits = jnp.where(phr_masks, -jnp.inf, attn_logits)
    attn_w = jax.nn.softmax(attn_logits, axis=1)
    attn_feat = jnp.einsum('bp,bpk->bk', attn_w, group)
    feat = jnp.concatenate([attn_feat, embedded], axis=1)
    return feat, (align_w, attn_w), (align_logits, attn_logits)


# ---------------------------------- main --------------------------------------
if __name__ == "__main__":
    # Small but representative sizes.
    B = 2            # batch
    F = 8            # feat_len (num visual features)
    V = 32           # vis_feat_size
    E = 24           # embedding_size
    P = 6            # number of phrases
    H = 40           # hidden_size
    Hb1 = 28         # sem_align_hidden_size
    Hb2 = 20         # sem_attn_hidden_size
    K = V + E

    key = jax.random.PRNGKey(0)
    ks = jax.random.split(key, 12)
    scale = 0.1

    # Parameters (deterministic synthetic init; bias params init to ones as in the module).
    W_al = jax.random.normal(ks[0], (Hb1, E), jnp.float32) * scale
    U_al = jax.random.normal(ks[1], (Hb1, V), jnp.float32) * scale
    b_al = jnp.ones((1, Hb1), jnp.float32)
    w_al = jax.random.normal(ks[2], (1, Hb1), jnp.float32) * scale
    W_at = jax.random.normal(ks[3], (Hb2, H), jnp.float32) * scale
    U_at = jax.random.normal(ks[4], (Hb2, K), jnp.float32) * scale
    b_at = jnp.ones((1, Hb2), jnp.float32)
    w_at = jax.random.normal(ks[5], (1, Hb2), jnp.float32) * scale
    params = (W_al, U_al, b_al, w_al, W_at, U_at, b_at, w_at)

    # Inputs.
    embedded = jax.random.normal(ks[6], (B, E), jnp.float32)
    last_hidden = jax.random.normal(ks[7], (B, H), jnp.float32)
    vis_feats = jax.random.normal(ks[8], (B, F, V), jnp.float32)
    phr_feats = jax.random.normal(ks[9], (B, P, E), jnp.float32)
    # mask: True == padded phrase position (batch 0 fully valid, batch 1 has P-2 valid)
    valid = jnp.array([P, P - 2], jnp.int32)
    phr_masks = jnp.arange(P)[None, :] >= valid[:, None]   # (B, P) bool

    out = feat_decoder(embedded, last_hidden, vis_feats, phr_feats, phr_masks, params)
    jax.block_until_ready(out)
    feat, (alw, atw), (alg, atg) = out

    # Validate against the pure-JAX reference.
    rfeat, (ralw, ratw), (ralg, ratg) = feat_decoder_ref(
        embedded, last_hidden, vis_feats, phr_feats, phr_masks, params)

    assert np.allclose(np.asarray(feat), np.asarray(rfeat), rtol=1e-5, atol=1e-5)
    assert np.allclose(np.asarray(alw), np.asarray(ralw), rtol=1e-5, atol=1e-5)
    assert np.allclose(np.asarray(atw), np.asarray(ratw), rtol=1e-5, atol=1e-5)
    assert np.allclose(np.asarray(alg), np.asarray(ralg), rtol=1e-5, atol=1e-5)
    assert np.allclose(np.asarray(atg), np.asarray(ratg), rtol=1e-5, atol=1e-5)

    print("KERNEL_OK")
</pallas_src>

<mosaic_0001>
module attributes {stable_mosaic.version = 11 : i64} {
  func.func @_feat_decoder_kernel(%arg0: memref<2x64xf32, #tpu.memory_space<vmem>>, %arg1: memref<16x32xf32, #tpu.memory_space<vmem>>, %arg2: memref<16x25xf32, #tpu.memory_space<vmem>>, %arg3: memref<104x48xf32, #tpu.memory_space<vmem>>, %arg4: memref<18x128xf32, #tpu.memory_space<vmem>>) attributes {dimension_semantics = [], scalar_prefetch = 0 : i64, scratch_operands = 0 : i64, tpu.core_type = #tpu.core_type<tc>} {
    %c0 = arith.constant 0 : index
    %c0_0 = arith.constant 0 : index
    %0 = vector.load %arg0[%c0, %c0_0] : memref<2x64xf32, #tpu.memory_space<vmem>>, vector<2x24xf32>
    %c0_1 = arith.constant 0 : index
    %c24 = arith.constant 24 : index
    %1 = vector.load %arg0[%c0_1, %c24] : memref<2x64xf32, #tpu.memory_space<vmem>>, vector<2x40xf32>
    %c0_2 = arith.constant 0 : index
    %c0_3 = arith.constant 0 : index
    %2 = vector.load %arg2[%c0_2, %c0_3] : memref<16x25xf32, #tpu.memory_space<vmem>>, vector<16x24xf32>
    %c0_4 = arith.constant 0 : index
    %c24_5 = arith.constant 24 : index
    %3 = vector.load %arg2[%c0_4, %c24_5] : memref<16x25xf32, #tpu.memory_space<vmem>>, vector<16x1xf32>
    %4 = vector.shape_cast %3 : vector<16x1xf32> to vector<2x8x1xf32>
    %c0_6 = arith.constant 0 : index
    %c0_7 = arith.constant 0 : index
    %5 = vector.load %arg1[%c0_6, %c0_7] : memref<16x32xf32, #tpu.memory_space<vmem>>, vector<16x32xf32>
    %c0_8 = arith.constant 0 : index
    %c0_9 = arith.constant 0 : index
    %6 = vector.load %arg3[%c0_8, %c0_9] : memref<104x48xf32, #tpu.memory_space<vmem>>, vector<24x48xf32>
    %c24_10 = arith.constant 24 : index
    %c0_11 = arith.constant 0 : index
    %7 = vector.load %arg3[%c24_10, %c0_11] : memref<104x48xf32, #tpu.memory_space<vmem>>, vector<32x48xf32>
    %c56 = arith.constant 56 : index
    %c0_12 = arith.constant 0 : index
    %8 = vector.load %arg3[%c56, %c0_12] : memref<104x48xf32, #tpu.memory_space<vmem>>, vector<40x20xf32>
    %c96 = arith.constant 96 : index
    %c0_13 = arith.constant 0 : index
    %9 = vector.load %arg3[%c96, %c0_13] : memref<104x48xf32, #tpu.memory_space<vmem>>, vector<1x28xf32>
    %c97 = arith.constant 97 : index
    %c0_14 = arith.constant 0 : index
    %10 = vector.load %arg3[%c97, %c0_14] : memref<104x48xf32, #tpu.memory_space<vmem>>, vector<1x28xf32>
    %c98 = arith.constant 98 : index
    %c0_15 = arith.constant 0 : index
    %11 = vector.load %arg3[%c98, %c0_15] : memref<104x48xf32, #tpu.memory_space<vmem>>, vector<1x20xf32>
    %c99 = arith.constant 99 : index
    %c0_16 = arith.constant 0 : index
    %12 = vector.load %arg3[%c99, %c0_16] : memref<104x48xf32, #tpu.memory_space<vmem>>, vector<1x20xf32>
    %cst = arith.constant dense<0.000000e+00> : vector<16x48xf32>
    %13 = tpu.matmul %2, %6, %cst {dimension_numbers = #tpu.dot_dimension_numbers<[1], [0], [0], [1], [0, 0, 1, 1], [], []>} : vector<16x24xf32>, vector<24x48xf32>, vector<16x48xf32> -> vector<16x48xf32>
    %cst_17 = arith.constant dense<0.000000e+00> : vector<16x48xf32>
    %14 = tpu.matmul %5, %7, %cst_17 {dimension_numbers = #tpu.dot_dimension_numbers<[1], [0], [0], [1], [0, 0, 1, 1], [], []>} : vector<16x32xf32>, vector<32x48xf32>, vector<16x48xf32> -> vector<16x48xf32>
    %cst_18 = arith.constant dense<0.000000e+00> : vector<2x20xf32>
    %15 = tpu.matmul %1, %8, %cst_18 {dimension_numbers = #tpu.dot_dimension_numbers<[1], [0], [0], [1], [0, 0, 1, 1], [], []>} : vector<2x40xf32>, vector<40x20xf32>, vector<2x20xf32> -> vector<2x20xf32>
    %16 = vector.broadcast %11 : vector<1x20xf32> to vector<2x20xf32>
    %17 = arith.addf %15, %16 : vector<2x20xf32>
    %18 = vector.extract_strided_slice %13 {offsets = [0, 0], sizes = [16, 28], strides = [1, 1]} : vector<16x48xf32> to vector<16x28xf32>
    %19 = vector.shape_cast %18 : vector<16x28xf32> to vector<2x8x28xf32>
    %20 = vector.extract_strided_slice %13 {offsets = [0, 28], sizes = [16, 20], strides = [1, 1]} : vector<16x48xf32> to vector<16x20xf32>
    %21 = vector.shape_cast %20 : vector<16x20xf32> to vector<2x8x20xf32>
    %22 = vector.extract_strided_slice %14 {offsets = [0, 0], sizes = [16, 28], strides = [1, 1]} : vector<16x48xf32> to vector<16x28xf32>
    %23 = vector.broadcast %9 : vector<1x28xf32> to vector<16x28xf32>
    %24 = arith.addf %22, %23 : vector<16x28xf32>
    %25 = vector.shape_cast %24 : vector<16x28xf32> to vector<2x8x28xf32>
    %26 = vector.extract_strided_slice %14 {offsets = [0, 28], sizes = [16, 20], strides = [1, 1]} : vector<16x48xf32> to vector<16x20xf32>
    %27 = vector.shape_cast %26 : vector<16x20xf32> to vector<2x8x20xf32>
    %28 = vector.shape_cast %19 : vector<2x8x28xf32> to vector<2x8x1x28xf32>
    %29 = vector.shape_cast %25 : vector<2x8x28xf32> to vector<2x1x8x28xf32>
    %30 = vector.broadcast %28 : vector<2x8x1x28xf32> to vector<2x8x8x28xf32>
    %31 = vector.broadcast %29 : vector<2x1x8x28xf32> to vector<2x8x8x28xf32>
    %32 = arith.addf %30, %31 : vector<2x8x8x28xf32>
    %33 = math.tanh %32 : vector<2x8x8x28xf32>
    %34 = vector.shape_cast %10 : vector<1x28xf32> to vector<1x1x1x28xf32>
    %35 = vector.broadcast %34 : vector<1x1x1x28xf32> to vector<2x8x8x28xf32>
    %36 = arith.mulf %33, %35 : vector<2x8x8x28xf32>
    %cst_19 = arith.constant dense<0.000000e+00> : vector<2x8x8xf32>
    %37 = vector.multi_reduction <add>, %36, %cst_19 [3] : vector<2x8x8x28xf32> to vector<2x8x8xf32>
    %cst_20 = arith.constant dense<0xFF800000> : vector<2x8xf32>
    %38 = vector.multi_reduction <maximumf>, %37, %cst_20 [2] : vector<2x8x8xf32> to vector<2x8xf32>
    %39 = vector.shape_cast %38 : vector<2x8xf32> to vector<2x8x1xf32>
    %40 = vector.broadcast %39 : vector<2x8x1xf32> to vector<2x8x8xf32>
    %41 = arith.subf %37, %40 : vector<2x8x8xf32>
    %42 = math.exp %41 : vector<2x8x8xf32>
    %cst_21 = arith.constant dense<0.000000e+00> : vector<2x8xf32>
    %43 = vector.multi_reduction <add>, %42, %cst_21 [2] : vector<2x8x8xf32> to vector<2x8xf32>
    %44 = vector.shape_cast %43 : vector<2x8xf32> to vector<2x8x1xf32>
    %45 = tpu.reciprocal %44 {approx = true} : vector<2x8x1xf32> -> vector<2x8x1xf32>
    %46 = arith.mulf %44, %45 : vector<2x8x1xf32>
    %cst_22 = arith.constant 2.000000e+00 : f32
    %47 = vector.broadcast %cst_22 : f32 to vector<2x8x1xf32>
    %48 = arith.subf %47, %46 : vector<2x8x1xf32>
    %49 = arith.mulf %45, %48 : vector<2x8x1xf32>
    %50 = vector.broadcast %49 : vector<2x8x1xf32> to vector<2x8x8xf32>
    %51 = arith.mulf %42, %50 : vector<2x8x8xf32>
    "tpu.trace_start"() <{level = 10 : i32, message = "bpf,bfh->bph"}> : () -> ()
    %cst_23 = arith.constant dense<0.000000e+00> : vector<2x8x20xf32>
    %52 = tpu.matmul %51, %27, %cst_23 {dimension_numbers = #tpu.dot_dimension_numbers<[2], [1], [1], [2], [0, 0, 0, 1, 1, 2], [0], [0]>} : vector<2x8x8xf32>, vector<2x8x20xf32>, vector<2x8x20xf32> -> vector<2x8x20xf32>
    "tpu.trace_stop"() : () -> ()
    %53 = arith.addf %52, %21 : vector<2x8x20xf32>
    %54 = vector.shape_cast %17 : vector<2x20xf32> to vector<2x1x20xf32>
    %55 = vector.broadcast %54 : vector<2x1x20xf32> to vector<2x8x20xf32>
    %56 = arith.addf %55, %53 : vector<2x8x20xf32>
    %57 = math.tanh %56 : vector<2x8x20xf32>
    %58 = vector.shape_cast %12 : vector<1x20xf32> to vector<1x1x20xf32>
    %59 = vector.broadcast %58 : vector<1x1x20xf32> to vector<2x8x20xf32>
    %60 = arith.mulf %57, %59 : vector<2x8x20xf32>
    %cst_24 = arith.constant dense<0.000000e+00> : vector<2x8xf32>
    %61 = vector.multi_reduction <add>, %60, %cst_24 [2] : vector<2x8x20xf32> to vector<2x8xf32>
    %62 = vector.shape_cast %61 : vector<2x8xf32> to vector<2x8x1xf32>
    %cst_25 = arith.constant 5.000000e-01 : f32
    %63 = vector.broadcast %cst_25 : f32 to vector<2x8x1xf32>
    %64 = arith.cmpf ogt, %4, %63 : vector<2x8x1xf32>
    %cst_26 = arith.constant 0xFF800000 : f32
    %65 = vector.broadcast %cst_26 : f32 to vector<2x8x1xf32>
    %66 = arith.select %64, %65, %62 : vector<2x8x1xi1>, vector<2x8x1xf32>
    %cst_27 = arith.constant dense<0xFF800000> : vector<2x1xf32>
    %67 = vector.multi_reduction <maximumf>, %66, %cst_27 [1] : vector<2x8x1xf32> to vector<2x1xf32>
    %68 = vector.shape_cast %67 : vector<2x1xf32> to vector<2x1x1xf32>
    %69 = vector.broadcast %68 : vector<2x1x1xf32> to vector<2x8x1xf32>
    %70 = arith.subf %66, %69 : vector<2x8x1xf32>
    %71 = math.exp %70 : vector<2x8x1xf32>
    %cst_28 = arith.constant dense<0.000000e+00> : vector<2x1xf32>
    %72 = vector.multi_reduction <add>, %71, %cst_28 [1] : vector<2x8x1xf32> to vector<2x1xf32>
    %73 = vector.shape_cast %72 : vector<2x1xf32> to vector<2x1x1xf32>
    %74 = tpu.reciprocal %73 {approx = true} : vector<2x1x1xf32> -> vector<2x1x1xf32>
    %75 = arith.mulf %73, %74 : vector<2x1x1xf32>
    %cst_29 = arith.constant 2.000000e+00 : f32
    %76 = vector.broadcast %cst_29 : f32 to vector<2x1x1xf32>
    %77 = arith.subf %76, %75 : vector<2x1x1xf32>
    %78 = arith.mulf %74, %77 : vector<2x1x1xf32>
    %79 = vector.broadcast %78 : vector<2x1x1xf32> to vector<2x8x1xf32>
    %80 = arith.mulf %71, %79 : vector<2x8x1xf32>
    %81 = vector.shape_cast %5 : vector<16x32xf32> to vector<2x8x32xf32>
    "tpu.trace_start"() <{level = 10 : i32, message = "bpf,bfv->bpv"}> : () -> ()
    %cst_30 = arith.constant dense<0.000000e+00> : vector<2x8x32xf32>
    %82 = tpu.matmul %51, %81, %cst_30 {dimension_numbers = #tpu.dot_dimension_numbers<[2], [1], [1], [2], [0, 0, 0, 1, 1, 2], [0], [0]>} : vector<2x8x8xf32>, vector<2x8x32xf32>, vector<2x8x32xf32> -> vector<2x8x32xf32>
    "tpu.trace_stop"() : () -> ()
    %83 = vector.broadcast %80 : vector<2x8x1xf32> to vector<2x8x32xf32>
    %84 = arith.mulf %82, %83 : vector<2x8x32xf32>
    %cst_31 = arith.constant dense<0.000000e+00> : vector<2x32xf32>
    %85 = vector.multi_reduction <add>, %84, %cst_31 [1] : vector<2x8x32xf32> to vector<2x32xf32>
    %86 = vector.shape_cast %2 : vector<16x24xf32> to vector<2x8x24xf32>
    %87 = vector.broadcast %80 : vector<2x8x1xf32> to vector<2x8x24xf32>
    %88 = arith.mulf %86, %87 : vector<2x8x24xf32>
    %cst_32 = arith.constant dense<0.000000e+00> : vector<2x24xf32>
    %89 = vector.multi_reduction <add>, %88, %cst_32 [1] : vector<2x8x24xf32> to vector<2x24xf32>
    %cst_33 = arith.constant 0.000000e+00 : f32
    %90 = vector.broadcast %cst_33 : f32 to vector<16x110xf32>
    %91 = vector.shape_cast %37 : vector<2x8x8xf32> to vector<16x8xf32>
    %92 = vector.shape_cast %51 : vector<2x8x8xf32> to vector<16x8xf32>
    %93 = vector.shape_cast %66 : vector<2x8x1xf32> to vector<16x1xf32>
    %94 = vector.shape_cast %80 : vector<2x8x1xf32> to vector<16x1xf32>
    %95 = tpu.concatenate %91, %92, %93, %94, %90 in 1 : vector<16x8xf32>, vector<16x8xf32>, vector<16x1xf32>, vector<16x1xf32>, vector<16x110xf32> -> vector<16x128xf32>
    %c0_34 = arith.constant 0 : index
    %c0_35 = arith.constant 0 : index
    %96 = vector.load %arg4[%c0_34, %c0_35] : memref<18x128xf32, #tpu.memory_space<vmem>>, vector<16x128xf32>
    tpu.vector_store %arg4[%c0_34, %c0_35], %95 {strides = array<i32>} : memref<18x128xf32, #tpu.memory_space<vmem>>, vector<16x128xf32>,
    %cst_36 = arith.constant 0.000000e+00 : f32
    %97 = vector.broadcast %cst_36 : f32 to vector<2x48xf32>
    %98 = tpu.concatenate %85, %89, %0, %97 in 1 : vector<2x32xf32>, vector<2x24xf32>, vector<2x24xf32>, vector<2x48xf32> -> vector<2x128xf32>
    %c16 = arith.constant 16 : index
    %c0_37 = arith.constant 0 : index
    %99 = vector.load %arg4[%c16, %c0_37] : memref<18x128xf32, #tpu.memory_space<vmem>>, vector<2x128xf32>
    tpu.vector_store %arg4[%c16, %c0_37], %98 {strides = array<i32>} : memref<18x128xf32, #tpu.memory_space<vmem>>, vector<2x128xf32>,
    return
  }
}

</mosaic_0001>

<llo_original>
// kernel: feat_decoder.1
$region0: #{feat_decoder.1}
  #allocation0 [shape = 'u32[]', space=smem, size = 0x4, offset = 0x4, fixed_abs, tag = 'smem constant byte address 0x4 - core index']
  #allocation1 [shape = 'u32[72,128]{1,0:T(1,128)}', space=vmem, size = 0x9000, scoped, tag = 'internal scratch']
  %s0 = inlined_call_operand.vmem [shape: f32[2,64], index: 0, kind: input, shape index: {}]
  %s1 = inlined_call_operand.vmem [shape: f32[16,32], index: 1, kind: input, shape index: {}]
  %s2 = inlined_call_operand.vmem [shape: f32[16,25], index: 2, kind: input, shape index: {}]
  %s3 = inlined_call_operand.vmem [shape: f32[104,48], index: 3, kind: input, shape index: {}]
  %s4 = inlined_call_operand.vmem [shape: f32[18,128], index: 4, kind: output, shape index: {}]
  %s5 = sld [smem:[#allocation0]]
  $region26: #{feat_decoder.1} parent=0
    _
  %s7 = ssub.s32 1, %s5
  %s8 = scalar_select 0, %s7, %s5
  // Predicated region
  $region2: #{feat_decoder.1} parent=0 // pred_check
    _
  $region3: #{feat_decoder.1} parent=0 // pred_check_branch
    %10 = sbr.rel (0) target = $region5
  $region4: #{feat_decoder.1} parent=0 // pred_region
    _
  $region5: #{feat_decoder.1} parent=0 // pred_fallthru
    _
  // Predicated region
  $region6: #{feat_decoder.1} parent=0 // pred_check
    _
  $region7: #{feat_decoder.1} parent=0 // pred_check_branch
    %12 = sbr.rel (0) target = $region9
  $region8: #{feat_decoder.1} parent=0 // pred_region
    _
  $region9: #{feat_decoder.1} parent=0 // pred_fallthru
    _
  // Predicated region
  $region10: #{feat_decoder.1} parent=0 // pred_check
    _
  $region11: #{feat_decoder.1} parent=0 // pred_check_branch
    %14 = sbr.rel (0) target = $region13
  $region12: #{feat_decoder.1} parent=0 // pred_region
    _
  $region13: #{feat_decoder.1} parent=0 // pred_fallthru
    _
  // Predicated region
  $region14: #{feat_decoder.1} parent=0 // pred_check
    _
  $region15: #{feat_decoder.1} parent=0 // pred_check_branch
    %16 = sbr.rel (0) target = $region17
  $region16: #{feat_decoder.1} parent=0 // pred_region
    _
  $region17: #{feat_decoder.1} parent=0 // pred_fallthru
    _
  %v17 = vld [vmem:[%s0] sm:$0x3]
  %v18 = vld [vmem:[%s2] sm:$0xff]
  %v19 = vld [vmem:[%s2 + $0x8] sm:$0xff]
  %v20 = vld [vmem:[%s1] sm:$0xff]
  %v21 = vld [vmem:[%s1 + $0x8] sm:$0xff]
  %v22 = vld [vmem:[%s3] sm:$0xff]
  %v23 = vld [vmem:[%s3 + $0x8] sm:$0xff]
  %v24 = vld [vmem:[%s3 + $0x10] sm:$0xff]
  %v25 = vld [vmem:[%s3 + $0x18] sm:$0xff]
  %v26 = vld [vmem:[%s3 + $0x20] sm:$0xff]
  %v27 = vld [vmem:[%s3 + $0x28] sm:$0xff]
  %v28 = vld [vmem:[%s3 + $0x30] sm:$0xff]
  %v29 = vld [vmem:[%s3 + $0x38] sm:$0xff]
  %v30 = vld [vmem:[%s3 + $0x40] sm:$0xff]
  %v31 = vld [vmem:[%s3 + $0x48] sm:$0xff]
  %v32 = vld [vmem:[%s3 + $0x50] sm:$0xff]
  %v33 = vld [vmem:[%s3 + $0x58] sm:$0xff]
  %v34 = vld [vmem:[%s3 + $0x60] sm:$0x1]
  %v35 = vld [vmem:[%s3 + $0x61] sm:$0x1]
  %v36 = vld [vmem:[%s3 + $0x62] sm:$0x1]
  %v37 = vld [vmem:[%s3 + $0x63] sm:$0x1]
  %vm38 = vcmask 195584
  %v40 = vsel %vm38, %v18, 0
  %v43 = vsel %vm38, %v19, 0
  %45 = vmatpush.msra.mxu0 0.0
  %46 = vmatpush.msra.mxu0 0.0
  %47 = vmatpush.msra.mxu0 0.0
  %48 = vmatpush.msra.mxu0 0.0
  %49 = vmatpush.msra.mxu0 0.0
  %50 = vmatpush.msra.mxu0 0.0
  %51 = vmatpush.msra.mxu0 0.0
  %52 = vmatpush.msra.mxu0 0.0
  %53 = vmatpush.msra.mxu0 0.0
  %54 = vmatpush.msra.mxu0 0.0
  %55 = vmatpush.msra.mxu0 0.0
  %56 = vmatpush.msra.mxu0 0.0
  %57 = vmatpush.msra.mxu0 0.0
  %58 = vmatpush.msra.mxu0 %v24
  %59 = vmatpush.msra.mxu0 %v23
  %60 = vmatpush.msra.mxu0 %v22
  %61 = vmatmul.f32.gmra.mxu0 %v40
  %v62 = vpop.f32.mrf.mxu0
  %v63 = vadd.f32 0.0, %v62
  %64 = vmatmul.f32.gmra.mxu0 %v43
  %v65 = vpop.f32.mrf.mxu0
  %v66 = vadd.f32 0.0, %v65
  %67 = vdwg.mxu0
  %vm68 = vcmask 261120
  %v70 = vsel %vm68, %v20, 0
  %v73 = vsel %vm68, %v21, 0
  %75 = vmatpush.msra.mxu0 0.0
  %76 = vmatpush.msra.mxu0 0.0
  %77 = vmatpush.msra.mxu0 0.0
  %78 = vmatpush.msra.mxu0 0.0
  %79 = vmatpush.msra.mxu0 0.0
  %80 = vmatpush.msra.mxu0 0.0
  %81 = vmatpush.msra.mxu0 0.0
  %82 = vmatpush.msra.mxu0 0.0
  %83 = vmatpush.msra.mxu0 0.0
  %84 = vmatpush.msra.mxu0 0.0
  %85 = vmatpush.msra.mxu0 0.0
  %86 = vmatpush.msra.mxu0 0.0
  %87 = vmatpush.msra.mxu0 %v28
  %88 = vmatpush.msra.mxu0 %v27
  %89 = vmatpush.msra.mxu0 %v26
  %90 = vmatpush.msra.mxu0 %v25
  %91 = vmatmul.f32.gmra.mxu0 %v70
  %v92 = vpop.f32.mrf.mxu0
  %v93 = vadd.f32 0.0, %v92
  %94 = vmatmul.f32.gmra.mxu0 %v73
  %v95 = vpop.f32.mrf.mxu0
  %v96 = vadd.f32 0.0, %v95
  %97 = vdwg.mxu0
  %v98 = vperm.slane %v36, 0
  %100 = vrot.lane.b32.xlu0 %v17, 104
  %v101 = vpop.permute.xlu0 %100
  %vm102 = vcmask 326656
  %v103 = vsel %vm102, %v101, 0
  %105 = vmatpush.msra.mxu0 0.0
  %106 = vmatpush.msra.mxu0 0.0
  %107 = vmatpush.msra.mxu0 0.0
  %108 = vmatpush.msra.mxu0 0.0
  %109 = vmatpush.msra.mxu0 0.0
  %110 = vmatpush.msra.mxu0 0.0
  %111 = vmatpush.msra.mxu0 0.0
  %112 = vmatpush.msra.mxu0 0.0
  %113 = vmatpush.msra.mxu0 0.0
  %114 = vmatpush.msra.mxu0 0.0
  %115 = vmatpush.msra.mxu0 0.0
  %116 = vmatpush.msra.mxu0 %v33
  %117 = vmatpush.msra.mxu0 %v32
  %118 = vmatpush.msra.mxu0 %v31
  %119 = vmatpush.msra.mxu0 %v30
  %120 = vmatpush.msra.mxu0 %v29
  %121 = vmatmul.f32.gmra.mxu0 %v103
  %v122 = vpop.f32.mrf.mxu0
  %v123 = vadd.f32 %v98, %v122
  %124 = vdwg.mxu0
  %v125 = vperm.slane %v34, 0
  %v126 = vadd.f32 %v93, %v125
  %v127 = vadd.f32 %v96, %v125
  %v130 = vrot.slane %v63, 1
  %v131 = vrot.slane %v63, 2
  %v132 = vrot.slane %v63, 3
  %v133 = vrot.slane %v63, 4
  %v134 = vrot.slane %v63, 5
  %v135 = vrot.slane %v63, 6
  %v136 = vrot.slane %v63, 7
  %v137 = vrot.slane %v66, 1
  %v138 = vrot.slane %v66, 2
  %v139 = vrot.slane %v66, 3
  %v140 = vrot.slane %v66, 4
  %v141 = vrot.slane %v66, 5
  %v142 = vrot.slane %v66, 6
  %v143 = vrot.slane %v66, 7
  %v144 = vperm.slane %v63, 0
  %v145 = vperm.slane %v130, 0
  %v146 = vperm.slane %v131, 0
  %v147 = vperm.slane %v132, 0
  %v148 = vperm.slane %v133, 0
  %v149 = vperm.slane %v134, 0
  %v150 = vperm.slane %v135, 0
  %v151 = vperm.slane %v136, 0
  %v152 = vperm.slane %v66, 0
  %v153 = vperm.slane %v137, 0
  %v154 = vperm.slane %v138, 0
  %v155 = vperm.slane %v139, 0
  %v156 = vperm.slane %v140, 0
  %v157 = vperm.slane %v141, 0
  %v158 = vperm.slane %v142, 0
  %v159 = vperm.slane %v143, 0
  %v176 = vadd.f32 %v144, %v126
  %v177 = vadd.f32 %v145, %v126
  %v178 = vadd.f32 %v146, %v126
  %v179 = vadd.f32 %v147, %v126
  %v180 = vadd.f32 %v148, %v126
  %v181 = vadd.f32 %v149, %v126
  %v182 = vadd.f32 %v150, %v126
  %v183 = vadd.f32 %v151, %v126
  %v184 = vadd.f32 %v152, %v127
  %v185 = vadd.f32 %v153, %v127
  %v186 = vadd.f32 %v154, %v127
  %v187 = vadd.f32 %v155, %v127
  %v188 = vadd.f32 %v156, %v127
  %v189 = vadd.f32 %v157, %v127
  %v190 = vadd.f32 %v158, %v127
  %v191 = vadd.f32 %v159, %v127
  %v192 = vtanh.pop %v176
  %v193 = vtanh.pop %v177
  %v194 = vtanh.pop %v178
  %v195 = vtanh.pop %v179
  %v196 = vtanh.pop %v180
  %v197 = vtanh.pop %v181
  %v198 = vtanh.pop %v182
  %v199 = vtanh.pop %v183
  %v200 = vtanh.pop %v184
  %v201 = vtanh.pop %v185
  %v202 = vtanh.pop %v186
  %v203 = vtanh.pop %v187
  %v204 = vtanh.pop %v188
  %v205 = vtanh.pop %v189
  %v206 = vtanh.pop %v190
  %v207 = vtanh.pop %v191
  %v208 = vperm.slane %v35, 0
  %v209 = vmul.f32 %v192, %v208
  %v210 = vmul.f32 %v193, %v208
  %v211 = vmul.f32 %v194, %v208
  %v212 = vmul.f32 %v195, %v208
  %v213 = vmul.f32 %v196, %v208
  %v214 = vmul.f32 %v197, %v208
  %v215 = vmul.f32 %v198, %v208
  %v216 = vmul.f32 %v199, %v208
  %v217 = vmul.f32 %v200, %v208
  %v218 = vmul.f32 %v201, %v208
  %v219 = vmul.f32 %v202, %v208
  %v220 = vmul.f32 %v203, %v208
  %v221 = vmul.f32 %v204, %v208
  %v222 = vmul.f32 %v205, %v208
  %v223 = vmul.f32 %v206, %v208
  %v224 = vmul.f32 %v207, %v208
  %vm225 = vcmask 228352
  %v226 = vsel %vm225, %v209, 0.0
  %227 = vadd.xlane.f32.xlu0 %v226
  %v228 = vpop.xlane.xlu0 %227
  %v229 = vsel %vm225, %v210, 0.0
  %230 = vadd.xlane.f32.xlu0 %v229
  %v231 = vpop.xlane.xlu0 %230
  %v232 = vsel %vm225, %v211, 0.0
  %233 = vadd.xlane.f32.xlu0 %v232
  %v234 = vpop.xlane.xlu0 %233
  %v235 = vsel %vm225, %v212, 0.0
  %236 = vadd.xlane.f32.xlu0 %v235
  %v237 = vpop.xlane.xlu0 %236
  %v238 = vsel %vm225, %v213, 0.0
  %239 = vadd.xlane.f32.xlu0 %v238
  %v240 = vpop.xlane.xlu0 %239
  %v241 = vsel %vm225, %v214, 0.0
  %242 = vadd.xlane.f32.xlu0 %v241
  %v243 = vpop.xlane.xlu0 %242
  %v244 = vsel %vm225, %v215, 0.0
  %245 = vadd.xlane.f32.xlu0 %v244
  %v246 = vpop.xlane.xlu0 %245
  %v247 = vsel %vm225, %v216, 0.0
  %248 = vadd.xlane.f32.xlu0 %v247
  %v249 = vpop.xlane.xlu0 %248
  %v250 = vsel %vm225, %v217, 0.0
  %251 = vadd.xlane.f32.xlu0 %v250
  %v252 = vpop.xlane.xlu0 %251
  %v253 = vsel %vm225, %v218, 0.0
  %254 = vadd.xlane.f32.xlu0 %v253
  %v255 = vpop.xlane.xlu0 %254
  %v256 = vsel %vm225, %v219, 0.0
  %257 = vadd.xlane.f32.xlu0 %v256
  %v258 = vpop.xlane.xlu0 %257
  %v259 = vsel %vm225, %v220, 0.0
  %260 = vadd.xlane.f32.xlu0 %v259
  %v261 = vpop.xlane.xlu0 %260
  %v262 = vsel %vm225, %v221, 0.0
  %263 = vadd.xlane.f32.xlu0 %v262
  %v264 = vpop.xlane.xlu0 %263
  %v265 = vsel %vm225, %v222, 0.0
  %266 = vadd.xlane.f32.xlu0 %v265
  %v267 = vpop.xlane.xlu0 %266
  %v268 = vsel %vm225, %v223, 0.0
  %269 = vadd.xlane.f32.xlu0 %v268
  %v270 = vpop.xlane.xlu0 %269
  %v271 = vsel %vm225, %v224, 0.0
  %272 = vadd.xlane.f32.xlu0 %v271
  %v273 = vpop.xlane.xlu0 %272
  %v290 = vlaneseq
  %v291 = vand.u32 %v290, 127
  %v292 = vperm.slane %v228, %v291
  %v293 = vperm.slane %v231, %v291
  %v294 = vperm.slane %v234, %v291
  %v295 = vperm.slane %v237, %v291
  %v296 = vperm.slane %v240, %v291
  %v297 = vperm.slane %v243, %v291
  %v298 = vperm.slane %v246, %v291
  %v299 = vperm.slane %v249, %v291
  %v300 = vperm.slane %v252, %v291
  %v301 = vperm.slane %v255, %v291
  %v302 = vperm.slane %v258, %v291
  %v303 = vperm.slane %v261, %v291
  %v304 = vperm.slane %v264, %v291
  %v305 = vperm.slane %v267, %v291
  %v306 = vperm.slane %v270, %v291
  %v307 = vperm.slane %v273, %v291
  %vm308 = vcmask 1041409
  %v309 = vsel %vm308, %v293, %v292
  %vm310 = vcmask 1042434
  %v311 = vsel %vm310, %v294, %v309
  %vm312 = vcmask 1043459
  %v313 = vsel %vm312, %v295, %v311
  %vm314 = vcmask 1044484
  %v315 = vsel %vm314, %v296, %v313
  %vm316 = vcmask 1045509
  %v317 = vsel %vm316, %v297, %v315
  %vm318 = vcmask 1046534
  %v319 = vsel %vm318, %v298, %v317
  %vm320 = vcmask 1047559
  %v321 = vsel %vm320, %v299, %v319
  %v322 = vsel %vm308, %v301, %v300
  %v323 = vsel %vm310, %v302, %v322
  %v324 = vsel %vm312, %v303, %v323
  %v325 = vsel %vm314, %v304, %v324
  %v326 = vsel %vm316, %v305, %v325
  %v327 = vsel %vm318, %v306, %v326
  %v328 = vsel %vm320, %v307, %v327
  %vm331 = vcmask 64512
  %v332 = vsel %vm331, %v321, -inf
  %333 = vmax.xlane.f32.xlu0 %v332
  %v334 = vpop.xlane.xlu0 %333
  %v335 = vsel %vm331, %v328, -inf
  %336 = vmax.xlane.f32.xlu0 %v335
  %v337 = vpop.xlane.xlu0 %336
  %v340 = vperm.slane %v334, 0
  %v341 = vperm.slane %v334, 1
  %v342 = vperm.slane %v334, 2
  %v343 = vperm.slane %v334, 3
  %v344 = vperm.slane %v334, 4
  %v345 = vperm.slane %v334, 5
  %v346 = vperm.slane %v334, 6
  %v347 = vperm.slane %v334, 7
  %v348 = vperm.slane %v337, 0
  %v349 = vperm.slane %v337, 1
  %v350 = vperm.slane %v337, 2
  %v351 = vperm.slane %v337, 3
  %v352 = vperm.slane %v337, 4
  %v353 = vperm.slane %v337, 5
  %v354 = vperm.slane %v337, 6
  %v355 = vperm.slane %v337, 7
  %v372 = vsub.f32 %v228, %v340
  %v373 = vsub.f32 %v231, %v341
  %v374 = vsub.f32 %v234, %v342
  %v375 = vsub.f32 %v237, %v343
  %v376 = vsub.f32 %v240, %v344
  %v377 = vsub.f32 %v243, %v345
  %v378 = vsub.f32 %v246, %v346
  %v379 = vsub.f32 %v249, %v347
  %v380 = vsub.f32 %v252, %v348
  %v381 = vsub.f32 %v255, %v349
  %v382 = vsub.f32 %v258, %v350
  %v383 = vsub.f32 %v261, %v351
  %v384 = vsub.f32 %v264, %v352
  %v385 = vsub.f32 %v267, %v353
  %v386 = vsub.f32 %v270, %v354
  %v387 = vsub.f32 %v273, %v355
  %v388 = vmul.f32 %v372, 1.442695
  %v389 = vpow.pop %v388
  %v390 = vmul.f32 %v373, 1.442695
  %v391 = vpow.pop %v390
  %v392 = vmul.f32 %v374, 1.442695
  %v393 = vpow.pop %v392
  %v394 = vmul.f32 %v375, 1.442695
  %v395 = vpow.pop %v394
  %v396 = vmul.f32 %v376, 1.442695
  %v397 = vpow.pop %v396
  %v398 = vmul.f32 %v377, 1.442695
  %v399 = vpow.pop %v398
  %v400 = vmul.f32 %v378, 1.442695
  %v401 = vpow.pop %v400
  %v402 = vmul.f32 %v379, 1.442695
  %v403 = vpow.pop %v402
  %v404 = vmul.f32 %v380, 1.442695
  %v405 = vpow.pop %v404
  %v406 = vmul.f32 %v381, 1.442695
  %v407 = vpow.pop %v406
  %v408 = vmul.f32 %v382, 1.442695
  %v409 = vpow.pop %v408
  %v410 = vmul.f32 %v383, 1.442695
  %v411 = vpow.pop %v410
  %v412 = vmul.f32 %v384, 1.442695
  %v413 = vpow.pop %v412
  %v414 = vmul.f32 %v385, 1.442695
  %v415 = vpow.pop %v414
  %v416 = vmul.f32 %v386, 1.442695
  %v417 = vpow.pop %v416
  %v418 = vmul.f32 %v387, 1.442695
  %v419 = vpow.pop %v418
  %436 = vset.pattern.permute.xlu0 0
  %437 = vperm.xlu0 %436, %v389
  %v438 = vpop.permute.xlu0 %437
  %439 = vset.pattern.permute.xlu0 0
  %440 = vperm.xlu0 %439, %v391
  %v441 = vpop.permute.xlu0 %440
  %442 = vset.pattern.permute.xlu0 0
  %443 = vperm.xlu0 %442, %v393
  %v444 = vpop.permute.xlu0 %443
  %445 = vset.pattern.permute.xlu0 0
  %446 = vperm.xlu0 %445, %v395
  %v447 = vpop.permute.xlu0 %446
  %448 = vset.pattern.permute.xlu0 0
  %449 = vperm.xlu0 %448, %v397
  %v450 = vpop.permute.xlu0 %449
  %451 = vset.pattern.permute.xlu0 0
  %452 = vperm.xlu0 %451, %v399
  %v453 = vpop.permute.xlu0 %452
  %454 = vset.pattern.permute.xlu0 0
  %455 = vperm.xlu0 %454, %v401
  %v456 = vpop.permute.xlu0 %455
  %457 = vset.pattern.permute.xlu0 0
  %458 = vperm.xlu0 %457, %v403
  %v459 = vpop.permute.xlu0 %458
  %460 = vset.pattern.permute.xlu0 0
  %461 = vperm.xlu0 %460, %v405
  %v462 = vpop.permute.xlu0 %461
  %463 = vset.pattern.permute.xlu0 0
  %464 = vperm.xlu0 %463, %v407
  %v465 = vpop.permute.xlu0 %464
  %466 = vset.pattern.permute.xlu0 0
  %467 = vperm.xlu0 %466, %v409
  %v468 = vpop.permute.xlu0 %467
  %469 = vset.pattern.permute.xlu0 0
  %470 = vperm.xlu0 %469, %v411
  %v471 = vpop.permute.xlu0 %470
  %472 = vset.pattern.permute.xlu0 0
  %473 = vperm.xlu0 %472, %v413
  %v474 = vpop.permute.xlu0 %473
  %475 = vset.pattern.permute.xlu0 0
  %476 = vperm.xlu0 %475, %v415
  %v477 = vpop.permute.xlu0 %476
  %478 = vset.pattern.permute.xlu0 0
  %479 = vperm.xlu0 %478, %v417
  %v480 = vpop.permute.xlu0 %479
  %481 = vset.pattern.permute.xlu0 0
  %482 = vperm.xlu0 %481, %v419
  %v483 = vpop.permute.xlu0 %482
  %v484 = vperm.slane %v438, %v291
  %v485 = vperm.slane %v441, %v291
  %v486 = vperm.slane %v444, %v291
  %v487 = vperm.slane %v447, %v291
  %v488 = vperm.slane %v450, %v291
  %v489 = vperm.slane %v453, %v291
  %v490 = vperm.slane %v456, %v291
  %v491 = vperm.slane %v459, %v291
  %v492 = vperm.slane %v462, %v291
  %v493 = vperm.slane %v465, %v291
  %v494 = vperm.slane %v468, %v291
  %v495 = vperm.slane %v471, %v291
  %v496 = vperm.slane %v474, %v291
  %v497 = vperm.slane %v477, %v291
  %v498 = vperm.slane %v480, %v291
  %v499 = vperm.slane %v483, %v291
  %v500 = vsel %vm308, %v485, %v484
  %v501 = vsel %vm310, %v486, %v500
  %v502 = vsel %vm312, %v487, %v501
  %v503 = vsel %vm314, %v488, %v502
  %v504 = vsel %vm316, %v489, %v503
  %v505 = vsel %vm318, %v490, %v504
  %v506 = vsel %vm320, %v491, %v505
  %v507 = vsel %vm308, %v493, %v492
  %v508 = vsel %vm310, %v494, %v507
  %v509 = vsel %vm312, %v495, %v508
  %v510 = vsel %vm314, %v496, %v509
  %v511 = vsel %vm316, %v497, %v510
  %v512 = vsel %vm318, %v498, %v511
  %v513 = vsel %vm320, %v499, %v512
  %v516 = vsel %vm331, %v506, 0.0
  %517 = vadd.xlane.f32.xlu0 %v516
  %v518 = vpop.xlane.xlu0 %517
  %v519 = vsel %vm331, %v513, 0.0
  %520 = vadd.xlane.f32.xlu0 %v519
  %v521 = vpop.xlane.xlu0 %520
  %v522 = vrcp.pop %v518
  %v523 = vrcp.pop %v521
  %v524 = vmul.f32 %v518, %v522
  %v525 = vmul.f32 %v521, %v523
  %v526 = vsub.f32 2.0, %v524
  %v527 = vsub.f32 2.0, %v525
  %v528 = vmul.f32 %v522, %v526
  %v529 = vmul.f32 %v523, %v527
  %v532 = vperm.slane %v528, 0
  %v533 = vperm.slane %v528, 1
  %v534 = vperm.slane %v528, 2
  %v535 = vperm.slane %v528, 3
  %v536 = vperm.slane %v528, 4
  %v537 = vperm.slane %v528, 5
  %v538 = vperm.slane %v528, 6
  %v539 = vperm.slane %v528, 7
  %v540 = vperm.slane %v529, 0
  %v541 = vperm.slane %v529, 1
  %v542 = vperm.slane %v529, 2
  %v543 = vperm.slane %v529, 3
  %v544 = vperm.slane %v529, 4
  %v545 = vperm.slane %v529, 5
  %v546 = vperm.slane %v529, 6
  %v547 = vperm.slane %v529, 7
  %v564 = vmul.f32 %v389, %v532
  %v565 = vmul.f32 %v391, %v533
  %v566 = vmul.f32 %v393, %v534
  %v567 = vmul.f32 %v395, %v535
  %v568 = vmul.f32 %v397, %v536
  %v569 = vmul.f32 %v399, %v537
  %v570 = vmul.f32 %v401, %v538
  %v571 = vmul.f32 %v403, %v539
  %v572 = vmul.f32 %v405, %v540
  %v573 = vmul.f32 %v407, %v541
  %v574 = vmul.f32 %v409, %v542
  %v575 = vmul.f32 %v411, %v543
  %v576 = vmul.f32 %v413, %v544
  %v577 = vmul.f32 %v415, %v545
  %v578 = vmul.f32 %v417, %v546
  %v579 = vmul.f32 %v419, %v547
  %588 = vset.pattern.permute.xlu0 0
  %589 = vperm.xlu0 %588, %v564
  %v590 = vpop.permute.xlu0 %589
  %591 = vset.pattern.permute.xlu0 0
  %592 = vperm.xlu0 %591, %v565
  %v593 = vpop.permute.xlu0 %592
  %594 = vset.pattern.permute.xlu0 0
  %595 = vperm.xlu0 %594, %v566
  %v596 = vpop.permute.xlu0 %595
  %597 = vset.pattern.permute.xlu0 0
  %598 = vperm.xlu0 %597, %v567
  %v599 = vpop.permute.xlu0 %598
  %600 = vset.pattern.permute.xlu0 0
  %601 = vperm.xlu0 %600, %v568
  %v602 = vpop.permute.xlu0 %601
  %603 = vset.pattern.permute.xlu0 0
  %604 = vperm.xlu0 %603, %v569
  %v605 = vpop.permute.xlu0 %604
  %606 = vset.pattern.permute.xlu0 0
  %607 = vperm.xlu0 %606, %v570
  %v608 = vpop.permute.xlu0 %607
  %609 = vset.pattern.permute.xlu0 0
  %610 = vperm.xlu0 %609, %v571
  %v611 = vpop.permute.xlu0 %610
  %v612 = vperm.slane %v590, %v291
  %v613 = vperm.slane %v593, %v291
  %v614 = vperm.slane %v596, %v291
  %v615 = vperm.slane %v599, %v291
  %v616 = vperm.slane %v602, %v291
  %v617 = vperm.slane %v605, %v291
  %v618 = vperm.slane %v608, %v291
  %v619 = vperm.slane %v611, %v291
  %v620 = vsel %vm308, %v613, %v612
  %v621 = vsel %vm310, %v614, %v620
  %v622 = vsel %vm312, %v615, %v621
  %v623 = vsel %vm314, %v616, %v622
  %v624 = vsel %vm316, %v617, %v623
  %v625 = vsel %vm318, %v618, %v624
  %v626 = vsel %vm320, %v619, %v625
  %628 = vrot.lane.b32.xlu0 %v93, 100
  %v629 = vpop.permute.xlu0 %628
  %631 = vrot.lane.b32.xlu0 %v63, 100
  %v632 = vpop.permute.xlu0 %631
  %v634 = vsel %vm331, %v626, 0
  %636 = vmatpush.msra.mxu0 0.0
  %637 = vmatpush.msra.mxu0 0.0
  %638 = vmatpush.msra.mxu0 0.0
  %639 = vmatpush.msra.mxu0 0.0
  %640 = vmatpush.msra.mxu0 0.0
  %641 = vmatpush.msra.mxu0 0.0
  %642 = vmatpush.msra.mxu0 0.0
  %643 = vmatpush.msra.mxu0 0.0
  %644 = vmatpush.msra.mxu0 0.0
  %645 = vmatpush.msra.mxu0 0.0
  %646 = vmatpush.msra.mxu0 0.0
  %647 = vmatpush.msra.mxu0 0.0
  %648 = vmatpush.msra.mxu0 0.0
  %649 = vmatpush.msra.mxu0 0.0
  %650 = vmatpush.msra.mxu0 0.0
  %651 = vmatpush.msra.mxu0 %v629
  %652 = vmatmul.f32.gmra.mxu0 %v634
  %v653 = vpop.f32.mrf.mxu0
  %v654 = vadd.f32 %v632, %v653
  %655 = vdwg.mxu0
  %664 = vset.pattern.permute.xlu0 0
  %665 = vperm.xlu0 %664, %v572
  %v666 = vpop.permute.xlu0 %665
  %667 = vset.pattern.permute.xlu0 0
  %668 = vperm.xlu0 %667, %v573
  %v669 = vpop.permute.xlu0 %668
  %670 = vset.pattern.permute.xlu0 0
  %671 = vperm.xlu0 %670, %v574
  %v672 = vpop.permute.xlu0 %671
  %673 = vset.pattern.permute.xlu0 0
  %674 = vperm.xlu0 %673, %v575
  %v675 = vpop.permute.xlu0 %674
  %676 = vset.pattern.permute.xlu0 0
  %677 = vperm.xlu0 %676, %v576
  %v678 = vpop.permute.xlu0 %677
  %679 = vset.pattern.permute.xlu0 0
  %680 = vperm.xlu0 %679, %v577
  %v681 = vpop.permute.xlu0 %680
  %682 = vset.pattern.permute.xlu0 0
  %683 = vperm.xlu0 %682, %v578
  %v684 = vpop.permute.xlu0 %683
  %685 = vset.pattern.permute.xlu0 0
  %686 = vperm.xlu0 %685, %v579
  %v687 = vpop.permute.xlu0 %686
  %v688 = vperm.slane %v666, %v291
  %v689 = vperm.slane %v669, %v291
  %v690 = vperm.slane %v672, %v291
  %v691 = vperm.slane %v675, %v291
  %v692 = vperm.slane %v678, %v291
  %v693 = vperm.slane %v681, %v291
  %v694 = vperm.slane %v684, %v291
  %v695 = vperm.slane %v687, %v291
  %v696 = vsel %vm308, %v689, %v688
  %v697 = vsel %vm310, %v690, %v696
  %v698 = vsel %vm312, %v691, %v697
  %v699 = vsel %vm314, %v692, %v698
  %v700 = vsel %vm316, %v693, %v699
  %v701 = vsel %vm318, %v694, %v700
  %v702 = vsel %vm320, %v695, %v701
  %704 = vrot.lane.b32.xlu0 %v96, 100
  %v705 = vpop.permute.xlu0 %704
  %707 = vrot.lane.b32.xlu0 %v66, 100
  %v708 = vpop.permute.xlu0 %707
  %v710 = vsel %vm331, %v702, 0
  %712 = vmatpush.msra.mxu0 0.0
  %713 = vmatpush.msra.mxu0 0.0
  %714 = vmatpush.msra.mxu0 0.0
  %715 = vmatpush.msra.mxu0 0.0
  %716 = vmatpush.msra.mxu0 0.0
  %717 = vmatpush.msra.mxu0 0.0
  %718 = vmatpush.msra.mxu0 0.0
  %719 = vmatpush.msra.mxu0 0.0
  %720 = vmatpush.msra.mxu0 0.0
  %721 = vmatpush.msra.mxu0 0.0
  %722 = vmatpush.msra.mxu0 0.0
  %723 = vmatpush.msra.mxu0 0.0
  %724 = vmatpush.msra.mxu0 0.0
  %725 = vmatpush.msra.mxu0 0.0
  %726 = vmatpush.msra.mxu0 0.0
  %727 = vmatpush.msra.mxu0 %v705
  %728 = vmatmul.f32.gmra.mxu0 %v710
  %v729 = vpop.f32.mrf.mxu0
  %v730 = vadd.f32 %v708, %v729
  %731 = vdwg.mxu0
  %v733 = vrot.slane %v123, 1
  %v734 = vperm.slane %v123, 0
  %v735 = vperm.slane %v733, 0
  %v738 = vadd.f32 %v734, %v654
  %v739 = vadd.f32 %v735, %v730
  %v740 = vtanh.pop %v738
  %v741 = vtanh.pop %v739
  %v742 = vperm.slane %v37, 0
  %v743 = vmul.f32 %v740, %v742
  %v744 = vmul.f32 %v741, %v742
  %vm745 = vcmask 162816
  %v746 = vsel %vm745, %v743, 0.0
  %747 = vadd.xlane.f32.xlu0 %v746
  %v748 = vpop.xlane.xlu0 %747
  %v749 = vsel %vm745, %v744, 0.0
  %750 = vadd.xlane.f32.xlu0 %v749
  %v751 = vpop.xlane.xlu0 %750
  %vm752 = vcmp.gt.f32.partialorder %v18, 0.5
  %vm753 = vcmp.gt.f32.partialorder %v19, 0.5
  %v754 = vsel %vm752, -inf, %v748
  %v755 = vsel %vm753, -inf, %v751
  %vm756 = vcmask 203968
  %v757 = vsel %vm756, %v754, -inf
  %v758 = vrot.slane %v757, 4
  %v759 = vmax.f32 %v757, %v758
  %v760 = vrot.slane %v759, 2
  %v761 = vmax.f32 %v759, %v760
  %v762 = vrot.slane %v761, 1
  %v763 = vmax.f32 %v761, %v762
  %v764 = vsel %vm756, %v755, -inf
  %v765 = vrot.slane %v764, 4
  %v766 = vmax.f32 %v764, %v765
  %v767 = vrot.slane %v766, 2
  %v768 = vmax.f32 %v766, %v767
  %v769 = vrot.slane %v768, 1
  %v770 = vmax.f32 %v768, %v769
  %v771 = vsub.f32 %v754, %v763
  %v772 = vsub.f32 %v755, %v770
  %v773 = vmul.f32 %v771, 1.442695
  %v774 = vpow.pop %v773
  %v775 = vmul.f32 %v772, 1.442695
  %v776 = vpow.pop %v775
  %v777 = vsel %vm756, %v774, 0.0
  %v778 = vrot.slane %v777, 4
  %v779 = vadd.f32 %v777, %v778
  %v780 = vrot.slane %v779, 2
  %v781 = vadd.f32 %v779, %v780
  %v782 = vrot.slane %v781, 1
  %v783 = vadd.f32 %v781, %v782
  %v784 = vsel %vm756, %v776, 0.0
  %v785 = vrot.slane %v784, 4
  %v786 = vadd.f32 %v784, %v785
  %v787 = vrot.slane %v786, 2
  %v788 = vadd.f32 %v786, %v787
  %v789 = vrot.slane %v788, 1
  %v790 = vadd.f32 %v788, %v789
  %v791 = vrcp.pop %v783
  %v792 = vrcp.pop %v790
  %v793 = vmul.f32 %v783, %v791
  %v794 = vmul.f32 %v790, %v792
  %v795 = vsub.f32 2.0, %v793
  %v796 = vsub.f32 2.0, %v794
  %v797 = vmul.f32 %v791, %v795
  %v798 = vmul.f32 %v792, %v796
  %v799 = vmul.f32 %v774, %v797
  %v800 = vmul.f32 %v776, %v798
  %801 = vmatpush.msra.mxu0 0.0
  %802 = vmatpush.msra.mxu0 0.0
  %803 = vmatpush.msra.mxu0 0.0
  %804 = vmatpush.msra.mxu0 0.0
  %805 = vmatpush.msra.mxu0 0.0
  %806 = vmatpush.msra.mxu0 0.0
  %807 = vmatpush.msra.mxu0 0.0
  %808 = vmatpush.msra.mxu0 0.0
  %809 = vmatpush.msra.mxu0 0.0
  %810 = vmatpush.msra.mxu0 0.0
  %811 = vmatpush.msra.mxu0 0.0
  %812 = vmatpush.msra.mxu0 0.0
  %813 = vmatpush.msra.mxu0 0.0
  %814 = vmatpush.msra.mxu0 0.0
  %815 = vmatpush.msra.mxu0 0.0
  %816 = vmatpush.msra.mxu0 %v20
  %817 = vmatmul.f32.gmra.mxu0 %v634
  %v818 = vpop.f32.mrf.mxu0
  %v819 = vadd.f32 0.0, %v818
  %820 = vdwg.mxu0
  %821 = vmatpush.msra.mxu0 0.0
  %822 = vmatpush.msra.mxu0 0.0
  %823 = vmatpush.msra.mxu0 0.0
  %824 = vmatpush.msra.mxu0 0.0
  %825 = vmatpush.msra.mxu0 0.0
  %826 = vmatpush.msra.mxu0 0.0
  %827 = vmatpush.msra.mxu0 0.0
  %828 = vmatpush.msra.mxu0 0.0
  %829 = vmatpush.msra.mxu0 0.0
  %830 = vmatpush.msra.mxu0 0.0
  %831 = vmatpush.msra.mxu0 0.0
  %832 = vmatpush.msra.mxu0 0.0
  %833 = vmatpush.msra.mxu0 0.0
  %834 = vmatpush.msra.mxu0 0.0
  %835 = vmatpush.msra.mxu0 0.0
  %836 = vmatpush.msra.mxu0 %v21
  %837 = vmatmul.f32.gmra.mxu0 %v710
  %v838 = vpop.f32.mrf.mxu0
  %v839 = vadd.f32 0.0, %v838
  %840 = vdwg.mxu0
  %842 = vset.pattern.permute.xlu0 24
  %843 = vperm.xlu0 %842, %v799
  %v844 = vpop.permute.xlu0 %843
  %847 = vset.pattern.permute.xlu0 24
  %848 = vperm.xlu0 %847, %v800
  %v849 = vpop.permute.xlu0 %848
  %v851 = vmul.f32 %v819, %v844
  %v852 = vmul.f32 %v839, %v849
  %v853 = vsel %vm68, %v851, 0.0
  %v854 = vrot.slane %v853, 4
  %v855 = vadd.f32 %v853, %v854
  %v856 = vrot.slane %v855, 2
  %v857 = vadd.f32 %v855, %v856
  %v858 = vrot.slane %v857, 1
  %v859 = vadd.f32 %v857, %v858
  %v860 = vsel %vm68, %v852, 0.0
  %v861 = vrot.slane %v860, 4
  %v862 = vadd.f32 %v860, %v861
  %v863 = vrot.slane %v862, 2
  %v864 = vadd.f32 %v862, %v863
  %v865 = vrot.slane %v864, 1
  %v866 = vadd.f32 %v864, %v865
  %v867 = vmul.f32 %v18, %v844
  %v868 = vmul.f32 %v19, %v849
  %v869 = vsel %vm38, %v867, 0.0
  %v870 = vrot.slane %v869, 4
  %v871 = vadd.f32 %v869, %v870
  %v872 = vrot.slane %v871, 2
  %v873 = vadd.f32 %v871, %v872
  %v874 = vrot.slane %v873, 1
  %v875 = vadd.f32 %v873, %v874
  %v876 = vsel %vm38, %v868, 0.0
  %v877 = vrot.slane %v876, 4
  %v878 = vadd.f32 %v876, %v877
  %v879 = vrot.slane %v878, 2
  %v880 = vadd.f32 %v878, %v879
  %v881 = vrot.slane %v880, 1
  %v882 = vadd.f32 %v880, %v881
  %v883 = vadd.s32 %v291, 4294967288
  %v884 = vperm.slane %v590, %v883
  %v885 = vperm.slane %v593, %v883
  %v886 = vperm.slane %v596, %v883
  %v887 = vperm.slane %v599, %v883
  %v888 = vperm.slane %v602, %v883
  %v889 = vperm.slane %v605, %v883
  %v890 = vperm.slane %v608, %v883
  %v891 = vperm.slane %v611, %v883
  %v892 = vperm.slane %v666, %v883
  %v893 = vperm.slane %v669, %v883
  %v894 = vperm.slane %v672, %v883
  %v895 = vperm.slane %v675, %v883
  %v896 = vperm.slane %v678, %v883
  %v897 = vperm.slane %v681, %v883
  %v898 = vperm.slane %v684, %v883
  %v899 = vperm.slane %v687, %v883
  %v900 = vsel %vm308, %v885, %v884
  %v901 = vsel %vm310, %v886, %v900
  %v902 = vsel %vm312, %v887, %v901
  %v903 = vsel %vm314, %v888, %v902
  %v904 = vsel %vm316, %v889, %v903
  %v905 = vsel %vm318, %v890, %v904
  %v906 = vsel %vm320, %v891, %v905
  %v907 = vsel %vm308, %v893, %v892
  %v908 = vsel %vm310, %v894, %v907
  %v909 = vsel %vm312, %v895, %v908
  %v910 = vsel %vm314, %v896, %v909
  %v911 = vsel %vm316, %v897, %v910
  %v912 = vsel %vm318, %v898, %v911
  %v913 = vsel %vm320, %v899, %v912
  %918 = vrot.lane.b32.xlu0 %v754, 120
  %v919 = vpop.permute.xlu0 %918
  %920 = vrot.lane.b32.xlu0 %v755, 120
  %v921 = vpop.permute.xlu0 %920
  %924 = vrot.lane.b32.xlu0 %v799, 121
  %v925 = vpop.permute.xlu0 %924
  %926 = vrot.lane.b32.xlu0 %v800, 121
  %v927 = vpop.permute.xlu0 %926
  %v930 = vsel %vm331, %v321, %v906
  %v931 = vsel %vm331, %v328, %v913
  %vm932 = vcmask 130048
  %v933 = vsel %vm932, %v930, %v919
  %v934 = vsel %vm932, %v931, %v921
  %vm935 = vcmask 138240
  %v936 = vsel %vm935, %v933, %v925
  %v937 = vsel %vm935, %v934, %v927
  %vm938 = vcmask 146432
  %v939 = vsel %vm938, %v936, 0.0
  %v940 = vsel %vm938, %v937, 0.0
  %941 = vst [vmem:[%s4] sm:$0xff] %v939
  %942 = vst [vmem:[%s4 + $0x8] sm:$0xff] %v940
  %v945 = vsel %vm308, %v866, %v859
  %v949 = vsel %vm308, %v882, %v875
  %950 = vrot.lane.b32.xlu0 %v949, 32
  %v951 = vpop.permute.xlu0 %950
  %953 = vrot.lane.b32.xlu0 %v17, 56
  %v954 = vpop.permute.xlu0 %953
  %v956 = vsel %vm68, %v945, %v951
  %vm957 = vcmask 457728
  %v958 = vsel %vm957, %v956, %v954
  %vm959 = vcmask 654336
  %v960 = vsel %vm959, %v958, 0.0
  %961 = vst [vmem:[%s4 + $0x10] sm:$0x3] %v960
  // Predicated region
  $region18: #{feat_decoder.1} parent=0 // pred_check
    _
  $region19: #{feat_decoder.1} parent=0 // pred_check_branch
    %963 = sbr.rel (0) target = $region21
  $region20: #{feat_decoder.1} parent=0 // pred_region
    _
  $region21: #{feat_decoder.1} parent=0 // pred_fallthru
    _
  // Predicated region
  $region22: #{feat_decoder.1} parent=0 // pred_check
    _
  $region23: #{feat_decoder.1} parent=0 // pred_check_branch
    %965 = sbr.rel (0) target = $region25
  $region24: #{feat_decoder.1} parent=0 // pred_region
    _
  $region25: #{feat_decoder.1} parent=0 // pred_fallthru
    _

</llo_original>
